<compile_context>
chip_gen: v6e
topology: v6e:2x2x1
jax: 0.10.0
libtpu: 0.0.40
codegen_flags: <defaults>
</compile_context>

<pallas_src>
import functools

import jax
import jax.numpy as jnp
from jax import lax
from jax.experimental import pallas as pl
from jax.experimental.pallas import tpu as pltpu

LANES = 128        # padded lane width for all packed slabs / in-kernel activations
OUT_LANES = 128    # lane-dense output width; result lives in column 0


# ---------------------------------------------------------------------------
# Kernel
# ---------------------------------------------------------------------------
def _dot(a, b):
    return jnp.dot(a, b, preferred_element_type=jnp.float32)


def gin_tuple3_kernel(data_ref, w_ref, b_ref, out_ref, *, N, B, H):
    # data slab rows: [0:3N] (A_k+I) stacked | [3N:4N] x | [4N:4N+B] pooling P
    # weight slab (bf16, each zero-padded to [128,128]):
    #   0: layer-1 conv first Linears lane-concat  [C, 3H]
    #   1: layer-1 conv second Linears block-diag  [3H, 3H]
    #   2: mlp_1 Linear(3H,H)     3: mlp_1 Linear(H,H)
    #   4: layer-2 conv first Linears lane-concat  [H, 3H]
    #   5: layer-2 conv second Linears block-diag  [3H, 3H]
    #   6: mlp_2 Linear(3H,H)
    # bias slab rows (f32, zero-padded to 128 lanes):
    #   0,1: layer-1 conv b1/b2 lane-concat   2,3: mlp_1 b1/b2
    #   4,5: layer-2 conv b1/b2 lane-concat   6  : mlp_2 b1
    #   7  : v = m2_w2 @ lin_w (row)          8  : col0 = m2_b2.lin_w, col1 = lin_b
    bf16 = jnp.bfloat16

    a_stk = data_ref[0:3 * N, 0:N]            # [3N, N]  bf16  (A_k + I) stacked
    x = data_ref[3 * N:4 * N, :]              # [N, 128] bf16  (C valid lanes, rest 0)
    pool = data_ref[4 * N:4 * N + B, 0:N]     # [B, N]   bf16

    biases = b_ref[...]                       # [9, 128] f32

    lane = lax.broadcasted_iota(jnp.int32, (N, LANES), 1)

    def select_diag(z):
        # z: [3N, 128]; keep branch-k rows for lanes [k*H, (k+1)*H). Pure VPU selects.
        return jnp.where(lane < H, z[0:N],
                         jnp.where(lane < 2 * H, z[N:2 * N], z[2 * N:3 * N]))

    def gin_layer(x_in_bf16, w_proj, b1, w2_bd, b2, relu_out):
        # Reassociated GINConv per branch: MLP_k((A_k+I)@x) with the first Linear
        # pushed through the aggregation: (A_k+I) @ (x @ W1_k), all 3 branches
        # lane-concatenated so every matmul is 128 lanes wide.
        xw = _dot(x_in_bf16, w_proj)                    # [N, 128] f32
        agg = _dot(a_stk, xw.astype(bf16))              # [3N, 128] f32 (all 3 aggregations)
        h = jnp.maximum(select_diag(agg) + b1, 0.0)     # [N, 128] f32
        o = _dot(h.astype(bf16), w2_bd) + b2            # [N, 128] f32
        return jnp.maximum(o, 0.0) if relu_out else o

    # ----- layer 1: three GIN convs + fusion MLP mlp_1 -----
    o1 = gin_layer(x, w_ref[0], biases[0:1], w_ref[1], biases[1:2], relu_out=False)
    t1 = jnp.maximum(_dot(o1.astype(bf16), w_ref[2]) + biases[2:3], 0.0)
    x1 = _dot(t1.astype(bf16), w_ref[3]) + biases[3:4]                   # [N, 128] (H valid)

    # ----- layer 2: relu(GIN) on each edge set + first half of mlp_2 -----
    o2 = gin_layer(x1.astype(bf16), w_ref[4], biases[4:5], w_ref[5], biases[5:6],
                   relu_out=True)
    t2 = jnp.maximum(_dot(o2.astype(bf16), w_ref[6]) + biases[6:7], 0.0)  # [N, 128]

    # ----- global_add_pool + mlp_2 second Linear + Linear(H,1), folded -----
    #   out_b = (P @ t2)_b . (m2_w2 @ lin_w) + n_b * (m2_b2 . lin_w) + lin_b
    pooled = _dot(pool, t2.astype(bf16))                                  # [B, 128] f32
    v_row = biases[7:8]                                                   # [1, 128]
    c = biases[8:9, 0:1]                                                  # m2_b2 . lin_w
    lin_b = biases[8:9, 1:2]
    n_b = jnp.sum(pool.astype(jnp.float32), axis=-1, keepdims=True)       # nodes per graph
    res = jnp.sum(pooled * v_row, axis=-1, keepdims=True) + n_b * c + lin_b
    out_ref[...] = jnp.broadcast_to(res, out_ref.shape)                   # lane-dense store


# ---------------------------------------------------------------------------
# Wrapper: slab packing (do once, outside the hot path) + pallas_call
# ---------------------------------------------------------------------------
def _full_spec(arr):
    nd = arr.ndim
    return pl.BlockSpec(arr.shape, lambda *_, _nd=nd: (0,) * _nd)


def _pad2(a, rows, cols):
    out = jnp.zeros((rows, cols), a.dtype)
    return out.at[:a.shape[0], :a.shape[1]].set(a)


def _block_diag3(ws, H):
    bd = jnp.zeros((3 * H, 3 * H), ws[0].dtype)
    for k in range(3):
        bd = bd.at[k * H:(k + 1) * H, k * H:(k + 1) * H].set(ws[k])
    return bd


def pack_params(params, hidden):
    """Pack all weights into a [7,128,128] bf16 slab and a [9,128] f32 bias/row slab."""
    H = hidden
    assert 3 * H <= LANES, "lane-concat width 3*H must fit in 128 lanes"
    w_list = [
        jnp.concatenate(params["c1_w1"], axis=1),   # 0: [C, 3H]
        _block_diag3(params["c1_w2"], H),           # 1: [3H, 3H]
        params["m1_w1"],                            # 2: [3H, H]
        params["m1_w2"],                            # 3: [H, H]
        jnp.concatenate(params["c2_w1"], axis=1),   # 4: [H, 3H]
        _block_diag3(params["c2_w2"], H),           # 5: [3H, 3H]
        params["m2_w1"],                            # 6: [3H, H]
    ]
    w_slab = jnp.stack([_pad2(w, LANES, LANES) for w in w_list]).astype(jnp.bfloat16)

    v = (params["m2_w2"] @ params["lin_w"]).T                        # [1, H]
    c = params["m2_b2"] @ params["lin_w"]                            # [1, 1]
    const_row = jnp.zeros((1, LANES), jnp.float32)
    const_row = const_row.at[0, 0].set(c[0, 0]).at[0, 1].set(params["lin_b"][0, 0])

    b_rows = [
        jnp.concatenate(params["c1_b1"], axis=1),   # 0
        jnp.concatenate(params["c1_b2"], axis=1),   # 1
        params["m1_b1"],                            # 2
        params["m1_b2"],                            # 3
        jnp.concatenate(params["c2_b1"], axis=1),   # 4
        jnp.concatenate(params["c2_b2"], axis=1),   # 5
        params["m2_b1"],                            # 6
        v,                                          # 7
    ]
    b_slab = jnp.concatenate(
        [_pad2(r, 1, LANES) for r in b_rows] + [const_row], axis=0).astype(jnp.float32)
    return w_slab, b_slab


def pack_graph(x, adjs, p):
    """Pack (A_k + I) x3, node features and pooling matrix into one bf16 slab."""
    N, C = x.shape
    B = p.shape[0]
    assert N <= LANES and C <= LANES
    eye = jnp.eye(N, dtype=jnp.float32)
    slab = jnp.zeros((4 * N + B, LANES), jnp.float32)
    for k, a in enumerate(adjs):
        slab = slab.at[k * N:(k + 1) * N, :N].set(a + eye)
    slab = slab.at[3 * N:4 * N, :C].set(x)
    slab = slab.at[4 * N:4 * N + B, :N].set(p)
    return slab.astype(jnp.bfloat16)


def gin_tuple3_forward(data_slab, w_slab, b_slab, *, num_nodes, num_graphs, hidden):
    """Runs the fused network; returns [num_graphs] f32."""
    N, B, H = num_nodes, num_graphs, hidden
    kernel = functools.partial(gin_tuple3_kernel, N=N, B=B, H=H)
    out = pl.pallas_call(
        kernel,
        out_shape=jax.ShapeDtypeStruct((B, OUT_LANES), jnp.float32),
        grid=(1,),
        in_specs=[_full_spec(data_slab), _full_spec(w_slab), _full_spec(b_slab)],
        out_specs=pl.BlockSpec((B, OUT_LANES), lambda *_: (0, 0)),
        compiler_params=pltpu.CompilerParams(
            dimension_semantics=("arbitrary",)),
    )(data_slab, w_slab, b_slab)
    return out[:, 0]


# ---------------------------------------------------------------------------
# Deterministic parameter initialization (PyTorch-Linear-style bounds)
# ---------------------------------------------------------------------------
def init_linear(key, fan_in, fan_out):
    kw, kb = jax.random.split(key)
    bound = 1.0 / jnp.sqrt(jnp.float32(fan_in))
    w = jax.random.uniform(kw, (fan_in, fan_out), jnp.float32, -bound, bound)
    b = jax.random.uniform(kb, (1, fan_out), jnp.float32, -bound, bound)
    return w, b


def init_params(key, input_channels, hidden):
    keys = iter(jax.random.split(key, 17))
    p = {"c1_w1": [], "c1_b1": [], "c1_w2": [], "c1_b2": [],
         "c2_w1": [], "c2_b1": [], "c2_w2": [], "c2_b2": []}
    for _ in range(3):                       # conv_1_1..conv_1_3 : MLP([C, H, H])
        w1, b1 = init_linear(next(keys), input_channels, hidden)
        w2, b2 = init_linear(next(keys), hidden, hidden)
        p["c1_w1"].append(w1); p["c1_b1"].append(b1)
        p["c1_w2"].append(w2); p["c1_b2"].append(b2)
    p["m1_w1"], p["m1_b1"] = init_linear(next(keys), 3 * hidden, hidden)
    p["m1_w2"], p["m1_b2"] = init_linear(next(keys), hidden, hidden)
    for _ in range(3):                       # conv_2_1..conv_2_3 : MLP([H, H, H])
        w1, b1 = init_linear(next(keys), hidden, hidden)
        w2, b2 = init_linear(next(keys), hidden, hidden)
        p["c2_w1"].append(w1); p["c2_b1"].append(b1)
        p["c2_w2"].append(w2); p["c2_b2"].append(b2)
    p["m2_w1"], p["m2_b1"] = init_linear(next(keys), 3 * hidden, hidden)
    p["m2_w2"], p["m2_b2"] = init_linear(next(keys), hidden, hidden)
    p["lin_w"], p["lin_b"] = init_linear(next(keys), hidden, 1)
    return p


# ---------------------------------------------------------------------------
# Example graph construction (three synthetic edge sets)
# ---------------------------------------------------------------------------
def build_graph_data(key, num_nodes, num_graphs, input_channels):
    npg = num_nodes // num_graphs
    idx = jnp.arange(num_nodes)
    gid = idx // npg
    local = idx % npg

    def adj_from_offset(off):
        src_a = (local + off) % npg + gid * npg
        src_b = (local - off) % npg + gid * npg
        a = jnp.zeros((num_nodes, num_nodes), jnp.float32)
        a = a.at[idx, src_a].set(1.0)
        a = a.at[idx, src_b].set(1.0)
        return a

    # edge_index_0 / _1 / _2 : intra-graph rings with skip 1 / 2 / 3
    adjs = tuple(adj_from_offset(o) for o in (1, 2, 3))

    # pooling matrix P[b, i] = 1 iff node i is in graph b
    p = (gid[None, :] == jnp.arange(num_graphs)[:, None]).astype(jnp.float32)

    x = jax.random.normal(key, (num_nodes, input_channels), jnp.float32)
    return x, adjs, p


if __name__ == "__main__":
    NUM_NODES = 16
    NUM_GRAPHS = 2
    INPUT_CHANNELS = 4
    HIDDEN = 32

    root = jax.random.PRNGKey(0)
    k_data, k_param = jax.random.split(root)

    x, adjs, p = build_graph_data(k_data, NUM_NODES, NUM_GRAPHS, INPUT_CHANNELS)
    params = init_params(k_param, INPUT_CHANNELS, HIDDEN)

    # Slab packing is done once, outside the per-call hot path.
    w_slab, b_slab = pack_params(params, HIDDEN)
    data_slab = pack_graph(x, adjs, p)

    out = gin_tuple3_forward(data_slab, w_slab, b_slab,
                             num_nodes=NUM_NODES, num_graphs=NUM_GRAPHS, hidden=HIDDEN)
    out = jax.block_until_ready(out)

    assert out.shape == (NUM_GRAPHS,)
    assert out.dtype == jnp.float32
    print("KERNEL_OK")
</pallas_src>

<mosaic_0001>
module attributes {stable_mosaic.version = 11 : i64} {
  func.func @gin_tuple3_kernel(%arg0: i32, %arg1: memref<66x128xbf16, #tpu.memory_space<vmem>>, %arg2: memref<7x128x128xbf16, #tpu.memory_space<vmem>>, %arg3: memref<9x128xf32, #tpu.memory_space<vmem>>, %arg4: memref<2x128xf32, #tpu.memory_space<vmem>>) attributes {dimension_semantics = [#tpu.dimension_semantics<arbitrary>], iteration_bounds = array<i64: 1>, scalar_prefetch = 0 : i64, scratch_operands = 0 : i64, tpu.core_type = #tpu.core_type<tc>, window_params = [{pipeline_mode = #tpu.pipeline_mode<synchronous>, transform_indices = @transform_0, window_bounds = array<i64: 66, 128>}, {pipeline_mode = #tpu.pipeline_mode<synchronous>, transform_indices = @transform_1, window_bounds = array<i64: 7, 128, 128>}, {pipeline_mode = #tpu.pipeline_mode<synchronous>, transform_indices = @transform_2, window_bounds = array<i64: 9, 128>}, {pipeline_mode = #tpu.pipeline_mode<synchronous>, transform_indices = @transform_3, window_bounds = array<i64: 2, 128>}]} {
    %c0 = arith.constant 0 : index
    %c0_0 = arith.constant 0 : index
    %0 = vector.load %arg1[%c0, %c0_0] : memref<66x128xbf16, #tpu.memory_space<vmem>>, vector<48x16xbf16>
    %c48 = arith.constant 48 : index
    %c0_1 = arith.constant 0 : index
    %1 = vector.load %arg1[%c48, %c0_1] : memref<66x128xbf16, #tpu.memory_space<vmem>>, vector<16x128xbf16>
    %c64 = arith.constant 64 : index
    %c0_2 = arith.constant 0 : index
    %2 = vector.load %arg1[%c64, %c0_2] : memref<66x128xbf16, #tpu.memory_space<vmem>>, vector<2x16xbf16>
    %c0_3 = arith.constant 0 : index
    %c0_4 = arith.constant 0 : index
    %3 = vector.load %arg3[%c0_3, %c0_4] : memref<9x128xf32, #tpu.memory_space<vmem>>, vector<9x128xf32>
    %4 = tpu.iota {dimensions = array<i32: 1>} : vector<16x128xi32>
    %c0_5 = arith.constant 0 : index
    %c0_6 = arith.constant 0 : index
    %c0_7 = arith.constant 0 : index
    %5 = vector.load %arg2[%c0_5, %c0_6, %c0_7] : memref<7x128x128xbf16, #tpu.memory_space<vmem>>, vector<1x128x128xbf16>
    %6 = vector.shape_cast %5 : vector<1x128x128xbf16> to vector<128x128xbf16>
    %7 = vector.extract_strided_slice %3 {offsets = [0, 0], sizes = [1, 128], strides = [1, 1]} : vector<9x128xf32> to vector<1x128xf32>
    %c1 = arith.constant 1 : index
    %c0_8 = arith.constant 0 : index
    %c0_9 = arith.constant 0 : index
    %8 = vector.load %arg2[%c1, %c0_8, %c0_9] : memref<7x128x128xbf16, #tpu.memory_space<vmem>>, vector<1x128x128xbf16>
    %9 = vector.shape_cast %8 : vector<1x128x128xbf16> to vector<128x128xbf16>
    %10 = vector.extract_strided_slice %3 {offsets = [1, 0], sizes = [1, 128], strides = [1, 1]} : vector<9x128xf32> to vector<1x128xf32>
    %cst = arith.constant dense<0.000000e+00> : vector<16x128xf32>
    %11 = tpu.matmul %1, %6, %cst {dimension_numbers = #tpu.dot_dimension_numbers<[1], [0], [0], [1], [0, 0, 1, 1], [], []>} : vector<16x128xbf16>, vector<128x128xbf16>, vector<16x128xf32> -> vector<16x128xf32>
    %12 = arith.truncf %11 : vector<16x128xf32> to vector<16x128xbf16>
    %cst_10 = arith.constant dense<0.000000e+00> : vector<48x128xf32>
    %13 = tpu.matmul %0, %12, %cst_10 {dimension_numbers = #tpu.dot_dimension_numbers<[1], [0], [0], [1], [0, 0, 1, 1], [], []>} : vector<48x16xbf16>, vector<16x128xbf16>, vector<48x128xf32> -> vector<48x128xf32>
    %c32_i32 = arith.constant 32 : i32
    %14 = vector.broadcast %c32_i32 : i32 to vector<16x128xi32>
    %15 = arith.cmpi slt, %4, %14 : vector<16x128xi32>
    %16 = vector.extract_strided_slice %13 {offsets = [0, 0], sizes = [16, 128], strides = [1, 1]} : vector<48x128xf32> to vector<16x128xf32>
    %c64_i32 = arith.constant 64 : i32
    %17 = vector.broadcast %c64_i32 : i32 to vector<16x128xi32>
    %18 = arith.cmpi slt, %4, %17 : vector<16x128xi32>
    %19 = vector.extract_strided_slice %13 {offsets = [16, 0], sizes = [16, 128], strides = [1, 1]} : vector<48x128xf32> to vector<16x128xf32>
    %20 = vector.extract_strided_slice %13 {offsets = [32, 0], sizes = [16, 128], strides = [1, 1]} : vector<48x128xf32> to vector<16x128xf32>
    %21 = arith.select %18, %19, %20 : vector<16x128xi1>, vector<16x128xf32>
    %22 = arith.select %15, %16, %21 : vector<16x128xi1>, vector<16x128xf32>
    %23 = vector.broadcast %7 : vector<1x128xf32> to vector<16x128xf32>
    %24 = arith.addf %22, %23 : vector<16x128xf32>
    %cst_11 = arith.constant 0.000000e+00 : f32
    %25 = vector.broadcast %cst_11 : f32 to vector<16x128xf32>
    %26 = arith.maximumf %24, %25 : vector<16x128xf32>
    %27 = arith.truncf %26 : vector<16x128xf32> to vector<16x128xbf16>
    %cst_12 = arith.constant dense<0.000000e+00> : vector<16x128xf32>
    %28 = tpu.matmul %27, %9, %cst_12 {dimension_numbers = #tpu.dot_dimension_numbers<[1], [0], [0], [1], [0, 0, 1, 1], [], []>} : vector<16x128xbf16>, vector<128x128xbf16>, vector<16x128xf32> -> vector<16x128xf32>
    %29 = vector.broadcast %10 : vector<1x128xf32> to vector<16x128xf32>
    %30 = arith.addf %28, %29 : vector<16x128xf32>
    %31 = arith.truncf %30 : vector<16x128xf32> to vector<16x128xbf16>
    %c2 = arith.constant 2 : index
    %c0_13 = arith.constant 0 : index
    %c0_14 = arith.constant 0 : index
    %32 = vector.load %arg2[%c2, %c0_13, %c0_14] : memref<7x128x128xbf16, #tpu.memory_space<vmem>>, vector<1x128x128xbf16>
    %33 = vector.shape_cast %32 : vector<1x128x128xbf16> to vector<128x128xbf16>
    %cst_15 = arith.constant dense<0.000000e+00> : vector<16x128xf32>
    %34 = tpu.matmul %31, %33, %cst_15 {dimension_numbers = #tpu.dot_dimension_numbers<[1], [0], [0], [1], [0, 0, 1, 1], [], []>} : vector<16x128xbf16>, vector<128x128xbf16>, vector<16x128xf32> -> vector<16x128xf32>
    %35 = vector.extract_strided_slice %3 {offsets = [2, 0], sizes = [1, 128], strides = [1, 1]} : vector<9x128xf32> to vector<1x128xf32>
    %36 = vector.broadcast %35 : vector<1x128xf32> to vector<16x128xf32>
    %37 = arith.addf %34, %36 : vector<16x128xf32>
    %cst_16 = arith.constant 0.000000e+00 : f32
    %38 = vector.broadcast %cst_16 : f32 to vector<16x128xf32>
    %39 = arith.maximumf %37, %38 : vector<16x128xf32>
    %40 = arith.truncf %39 : vector<16x128xf32> to vector<16x128xbf16>
    %c3 = arith.constant 3 : index
    %c0_17 = arith.constant 0 : index
    %c0_18 = arith.constant 0 : index
    %41 = vector.load %arg2[%c3, %c0_17, %c0_18] : memref<7x128x128xbf16, #tpu.memory_space<vmem>>, vector<1x128x128xbf16>
    %42 = vector.shape_cast %41 : vector<1x128x128xbf16> to vector<128x128xbf16>
    %cst_19 = arith.constant dense<0.000000e+00> : vector<16x128xf32>
    %43 = tpu.matmul %40, %42, %cst_19 {dimension_numbers = #tpu.dot_dimension_numbers<[1], [0], [0], [1], [0, 0, 1, 1], [], []>} : vector<16x128xbf16>, vector<128x128xbf16>, vector<16x128xf32> -> vector<16x128xf32>
    %44 = vector.extract_strided_slice %3 {offsets = [3, 0], sizes = [1, 128], strides = [1, 1]} : vector<9x128xf32> to vector<1x128xf32>
    %45 = vector.broadcast %44 : vector<1x128xf32> to vector<16x128xf32>
    %46 = arith.addf %43, %45 : vector<16x128xf32>
    %47 = arith.truncf %46 : vector<16x128xf32> to vector<16x128xbf16>
    %c4 = arith.constant 4 : index
    %c0_20 = arith.constant 0 : index
    %c0_21 = arith.constant 0 : index
    %48 = vector.load %arg2[%c4, %c0_20, %c0_21] : memref<7x128x128xbf16, #tpu.memory_space<vmem>>, vector<1x128x128xbf16>
    %49 = vector.shape_cast %48 : vector<1x128x128xbf16> to vector<128x128xbf16>
    %50 = vector.extract_strided_slice %3 {offsets = [4, 0], sizes = [1, 128], strides = [1, 1]} : vector<9x128xf32> to vector<1x128xf32>
    %c5 = arith.constant 5 : index
    %c0_22 = arith.constant 0 : index
    %c0_23 = arith.constant 0 : index
    %51 = vector.load %arg2[%c5, %c0_22, %c0_23] : memref<7x128x128xbf16, #tpu.memory_space<vmem>>, vector<1x128x128xbf16>
    %52 = vector.shape_cast %51 : vector<1x128x128xbf16> to vector<128x128xbf16>
    %53 = vector.extract_strided_slice %3 {offsets = [5, 0], sizes = [1, 128], strides = [1, 1]} : vector<9x128xf32> to vector<1x128xf32>
    %cst_24 = arith.constant dense<0.000000e+00> : vector<16x128xf32>
    %54 = tpu.matmul %47, %49, %cst_24 {dimension_numbers = #tpu.dot_dimension_numbers<[1], [0], [0], [1], [0, 0, 1, 1], [], []>} : vector<16x128xbf16>, vector<128x128xbf16>, vector<16x128xf32> -> vector<16x128xf32>
    %55 = arith.truncf %54 : vector<16x128xf32> to vector<16x128xbf16>
    %cst_25 = arith.constant dense<0.000000e+00> : vector<48x128xf32>
    %56 = tpu.matmul %0, %55, %cst_25 {dimension_numbers = #tpu.dot_dimension_numbers<[1], [0], [0], [1], [0, 0, 1, 1], [], []>} : vector<48x16xbf16>, vector<16x128xbf16>, vector<48x128xf32> -> vector<48x128xf32>
    %c32_i32_26 = arith.constant 32 : i32
    %57 = vector.broadcast %c32_i32_26 : i32 to vector<16x128xi32>
    %58 = arith.cmpi slt, %4, %57 : vector<16x128xi32>
    %59 = vector.extract_strided_slice %56 {offsets = [0, 0], sizes = [16, 128], strides = [1, 1]} : vector<48x128xf32> to vector<16x128xf32>
    %c64_i32_27 = arith.constant 64 : i32
    %60 = vector.broadcast %c64_i32_27 : i32 to vector<16x128xi32>
    %61 = arith.cmpi slt, %4, %60 : vector<16x128xi32>
    %62 = vector.extract_strided_slice %56 {offsets = [16, 0], sizes = [16, 128], strides = [1, 1]} : vector<48x128xf32> to vector<16x128xf32>
    %63 = vector.extract_strided_slice %56 {offsets = [32, 0], sizes = [16, 128], strides = [1, 1]} : vector<48x128xf32> to vector<16x128xf32>
    %64 = arith.select %61, %62, %63 : vector<16x128xi1>, vector<16x128xf32>
    %65 = arith.select %58, %59, %64 : vector<16x128xi1>, vector<16x128xf32>
    %66 = vector.broadcast %50 : vector<1x128xf32> to vector<16x128xf32>
    %67 = arith.addf %65, %66 : vector<16x128xf32>
    %cst_28 = arith.constant 0.000000e+00 : f32
    %68 = vector.broadcast %cst_28 : f32 to vector<16x128xf32>
    %69 = arith.maximumf %67, %68 : vector<16x128xf32>
    %70 = arith.truncf %69 : vector<16x128xf32> to vector<16x128xbf16>
    %cst_29 = arith.constant dense<0.000000e+00> : vector<16x128xf32>
    %71 = tpu.matmul %70, %52, %cst_29 {dimension_numbers = #tpu.dot_dimension_numbers<[1], [0], [0], [1], [0, 0, 1, 1], [], []>} : vector<16x128xbf16>, vector<128x128xbf16>, vector<16x128xf32> -> vector<16x128xf32>
    %72 = vector.broadcast %53 : vector<1x128xf32> to vector<16x128xf32>
    %73 = arith.addf %71, %72 : vector<16x128xf32>
    %cst_30 = arith.constant 0.000000e+00 : f32
    %74 = vector.broadcast %cst_30 : f32 to vector<16x128xf32>
    %75 = arith.maximumf %73, %74 : vector<16x128xf32>
    %76 = arith.truncf %75 : vector<16x128xf32> to vector<16x128xbf16>
    %c6 = arith.constant 6 : index
    %c0_31 = arith.constant 0 : index
    %c0_32 = arith.constant 0 : index
    %77 = vector.load %arg2[%c6, %c0_31, %c0_32] : memref<7x128x128xbf16, #tpu.memory_space<vmem>>, vector<1x128x128xbf16>
    %78 = vector.shape_cast %77 : vector<1x128x128xbf16> to vector<128x128xbf16>
    %cst_33 = arith.constant dense<0.000000e+00> : vector<16x128xf32>
    %79 = tpu.matmul %76, %78, %cst_33 {dimension_numbers = #tpu.dot_dimension_numbers<[1], [0], [0], [1], [0, 0, 1, 1], [], []>} : vector<16x128xbf16>, vector<128x128xbf16>, vector<16x128xf32> -> vector<16x128xf32>
    %80 = vector.extract_strided_slice %3 {offsets = [6, 0], sizes = [1, 128], strides = [1, 1]} : vector<9x128xf32> to vector<1x128xf32>
    %81 = vector.broadcast %80 : vector<1x128xf32> to vector<16x128xf32>
    %82 = arith.addf %79, %81 : vector<16x128xf32>
    %cst_34 = arith.constant 0.000000e+00 : f32
    %83 = vector.broadcast %cst_34 : f32 to vector<16x128xf32>
    %84 = arith.maximumf %82, %83 : vector<16x128xf32>
    %85 = arith.truncf %84 : vector<16x128xf32> to vector<16x128xbf16>
    %cst_35 = arith.constant dense<0.000000e+00> : vector<2x128xf32>
    %86 = tpu.matmul %2, %85, %cst_35 {dimension_numbers = #tpu.dot_dimension_numbers<[1], [0], [0], [1], [0, 0, 1, 1], [], []>} : vector<2x16xbf16>, vector<16x128xbf16>, vector<2x128xf32> -> vector<2x128xf32>
    %87 = vector.extract_strided_slice %3 {offsets = [7, 0], sizes = [1, 128], strides = [1, 1]} : vector<9x128xf32> to vector<1x128xf32>
    %88 = vector.extract_strided_slice %3 {offsets = [8, 0], sizes = [1, 1], strides = [1, 1]} : vector<9x128xf32> to vector<1x1xf32>
    %89 = vector.extract_strided_slice %3 {offsets = [8, 1], sizes = [1, 1], strides = [1, 1]} : vector<9x128xf32> to vector<1x1xf32>
    %90 = arith.extf %2 : vector<2x16xbf16> to vector<2x16xf32>
    %cst_36 = arith.constant dense<0.000000e+00> : vector<2xf32>
    %91 = vector.multi_reduction <add>, %90, %cst_36 [1] : vector<2x16xf32> to vector<2xf32>
    %92 = vector.shape_cast %91 : vector<2xf32> to vector<2x1xf32>
    %93 = vector.broadcast %87 : vector<1x128xf32> to vector<2x128xf32>
    %94 = arith.mulf %86, %93 : vector<2x128xf32>
    %cst_37 = arith.constant dense<0.000000e+00> : vector<2xf32>
    %95 = vector.multi_reduction <add>, %94, %cst_37 [1] : vector<2x128xf32> to vector<2xf32>
    %96 = vector.shape_cast %95 : vector<2xf32> to vector<2x1xf32>
    %97 = vector.broadcast %88 : vector<1x1xf32> to vector<2x1xf32>
    %98 = arith.mulf %92, %97 : vector<2x1xf32>
    %99 = arith.addf %96, %98 : vector<2x1xf32>
    %100 = vector.broadcast %89 : vector<1x1xf32> to vector<2x1xf32>
    %101 = arith.addf %99, %100 : vector<2x1xf32>
    %102 = vector.shape_cast %101 : vector<2x1xf32> to vector<2x1xf32>
    %103 = vector.broadcast %102 : vector<2x1xf32> to vector<2x128xf32>
    %c0_38 = arith.constant 0 : index
    %c0_39 = arith.constant 0 : index
    %104 = vector.load %arg4[%c0_38, %c0_39] : memref<2x128xf32, #tpu.memory_space<vmem>>, vector<2x128xf32>
    tpu.vector_store %arg4[%c0_38, %c0_39], %103 {strides = array<i32>} : memref<2x128xf32, #tpu.memory_space<vmem>>, vector<2x128xf32>,
    return
  }
  func.func @transform_0(%arg0: i32) -> (i32, i32) {
    %c0_i32 = arith.constant 0 : i32
    %c0_i32_0 = arith.constant 0 : i32
    %c0_i32_1 = arith.constant 0 : i32
    return %c0_i32, %c0_i32_0 : i32, i32
  }
  func.func @transform_1(%arg0: i32) -> (i32, i32, i32) {
    %c0_i32 = arith.constant 0 : i32
    %c0_i32_0 = arith.constant 0 : i32
    %c0_i32_1 = arith.constant 0 : i32
    %c0_i32_2 = arith.constant 0 : i32
    return %c0_i32, %c0_i32_0, %c0_i32_1 : i32, i32, i32
  }
  func.func @transform_2(%arg0: i32) -> (i32, i32) {
    %c0_i32 = arith.constant 0 : i32
    %c0_i32_0 = arith.constant 0 : i32
    %c0_i32_1 = arith.constant 0 : i32
    return %c0_i32, %c0_i32_0 : i32, i32
  }
  func.func @transform_3(%arg0: i32) -> (i32, i32) {
    %c0_i32 = arith.constant 0 : i32
    %c0_i32_0 = arith.constant 0 : i32
    %c0_i32_1 = arith.constant 0 : i32
    return %c0_i32, %c0_i32_0 : i32, i32
  }
}

</mosaic_0001>

<llo_original>
// kernel: tpu_custom_call.1
$region0: #{tpu_custom_call.1}
  #allocation0 [shape = 'u32[]', space=smem, size = 0x4, offset = 0x4, fixed_abs, tag = 'smem constant byte address 0x4 - core index']
  #allocation1 [shape = 'u32[144,128]{1,0:T(1,128)}', space=vmem, size = 0x12000, scoped, tag = 'internal scratch']
  %s0 = inlined_call_operand.hbm [shape: bf16[66,128], index: 0, kind: input, shape index: {}]
  %s1 = inlined_call_operand.hbm [shape: bf16[7,128,128], index: 1, kind: input, shape index: {}]
  %s2 = inlined_call_operand.hbm [shape: f32[9,128], index: 2, kind: input, shape index: {}]
  %s3 = inlined_call_operand.hbm [shape: f32[2,128], index: 3, kind: output, shape index: {}]
  %s4 = sld [smem:[#allocation0]]
  $region34: #{tpu_custom_call.1} parent=0
    _
  %s6 = ssub.s32 1, %s4
  %s7 = scalar_select 0, %s6, %s4
  $region1: #{tpu_custom_call.1} parent=0
    #allocation2 [shape = 'u8[18432]{0}', space=vmem, size = 0x4800, scoped, tag = 'input window, operand 0, single buffered']
    #allocation3 [shape = 's32[1]{0}', space=sflag, size = 0x4, scoped, tag = 'scoped memory for tpu_custom_call.1']
    #allocation4 [shape = 's32[1]{0}', space=sflag, size = 0x4, scoped, tag = 'scoped memory for tpu_custom_call.1']
    #allocation5 [shape = 'u8[229376]{0}', space=vmem, size = 0x38000, scoped, tag = 'input window, operand 1, single buffered']
    #allocation6 [shape = 's32[1]{0}', space=sflag, size = 0x4, scoped, tag = 'scoped memory for tpu_custom_call.1']
    #allocation7 [shape = 'u8[8192]{0}', space=vmem, size = 0x2000, scoped, tag = 'input window, operand 2, single buffered']
    #allocation8 [shape = 'u8[1024]{0}', space=vmem, size = 0x400, scoped, tag = 'output window, operand 0, single buffered']
    %8 = vsyncpa [#allocation3], 0
    %9 = vsyncpa [#allocation6], 0
    %10 = vsyncpa [#allocation4], 0
    // Predicated region
    $region2: #{tpu_custom_call.1} parent=1 // pred_check
      _
    $region3: #{tpu_custom_call.1} parent=1 // pred_check_branch
      %12 = sbr.rel (0) target = $region5
    $region4: #{tpu_custom_call.1} parent=1 // pred_region
      %s14 = ssub.s32 576, 576
      %15 = vsyncadd [#allocation3], %s14
      %s16 = sshll.u32 [#allocation2], 4
      %s17 = int_to_ptr.vmem [resolvable:$true] %s16
      %22 = dma.hbm_to_vmem [thread:$0]  %s0, 576, %s17, [#allocation3], 64, 64, 4
    $region5: #{tpu_custom_call.1} parent=1 // pred_fallthru
      _
    // Predicated region
    $region6: #{tpu_custom_call.1} parent=1 // pred_check
      _
    $region7: #{tpu_custom_call.1} parent=1 // pred_check_branch
      %24 = sbr.rel (0) target = $region9
    $region8: #{tpu_custom_call.1} parent=1 // pred_region
      %s26 = ssub.s32 7168, 7168
      %27 = vsyncadd [#allocation6], %s26
      %s28 = sshll.u32 [#allocation5], 4
      %s29 = int_to_ptr.vmem [resolvable:$true] %s28
      %34 = dma.hbm_to_vmem [thread:$0]  %s1, 7168, %s29, [#allocation6], 64, 64, 4
    $region9: #{tpu_custom_call.1} parent=1 // pred_fallthru
      _
    // Predicated region
    $region10: #{tpu_custom_call.1} parent=1 // pred_check
      _
    $region11: #{tpu_custom_call.1} parent=1 // pred_check_branch
      %36 = sbr.rel (0) target = $region13
    $region12: #{tpu_custom_call.1} parent=1 // pred_region
      %s38 = ssub.s32 256, 256
      %39 = vsyncadd [#allocation6], %s38
      %s40 = sshll.u32 [#allocation7], 4
      %s41 = int_to_ptr.vmem [resolvable:$true] %s40
      %46 = dma.hbm_to_vmem [thread:$0]  %s2, 256, %s41, [#allocation6], 128, 128, 8
    $region13: #{tpu_custom_call.1} parent=1 // pred_fallthru
      _
    // Predicated region
    $region14: #{tpu_custom_call.1} parent=1 // pred_check
      _
    $region15: #{tpu_custom_call.1} parent=1 // pred_check_branch
      %48 = sbr.rel (0) target = $region17
    $region16: #{tpu_custom_call.1} parent=1 // pred_region
      %49 = dma.done [#allocation3], 576
    $region17: #{tpu_custom_call.1} parent=1 // pred_fallthru
      _
    // Predicated region
    $region18: #{tpu_custom_call.1} parent=1 // pred_check
      _
    $region19: #{tpu_custom_call.1} parent=1 // pred_check_branch
      %51 = sbr.rel (0) target = $region21
    $region20: #{tpu_custom_call.1} parent=1 // pred_region
      %52 = dma.done [#allocation6], 7168
    $region21: #{tpu_custom_call.1} parent=1 // pred_fallthru
      _
    // Predicated region
    $region22: #{tpu_custom_call.1} parent=1 // pred_check
      _
    $region23: #{tpu_custom_call.1} parent=1 // pred_check_branch
      %54 = sbr.rel (0) target = $region25
    $region24: #{tpu_custom_call.1} parent=1 // pred_region
      %55 = dma.done [#allocation6], 256
    $region25: #{tpu_custom_call.1} parent=1 // pred_fallthru
      _
    %v57 = vld [vmem:[#allocation2] sm:$0xf]
    %v58 = vld [vmem:[#allocation2 + $0x4] sm:$0xf]
    %v59 = vld [vmem:[#allocation2 + $0x8] sm:$0xf]
    %v60 = vld [vmem:[#allocation2 + $0xc] sm:$0xf]
    %v61 = vld [vmem:[#allocation2 + $0x10] sm:$0xf]
    %v62 = vld [vmem:[#allocation2 + $0x14] sm:$0xf]
    %v63 = vld [vmem:[#allocation2 + $0x18] sm:$0xf]
    %v64 = vld [vmem:[#allocation2 + $0x1c] sm:$0xf]
    %v65 = vld [vmem:[#allocation2 + $0x20] sm:$0x1]
    %v66 = vld [vmem:[#allocation7] sm:$0xff]
    %v67 = vld [vmem:[#allocation7 + $0x8] sm:$0x1]
    %v68 = vlaneseq
    %v69 = vand.u32 %v68, 127
    %v70 = vld [vmem:[#allocation5] sm:$0xf]
    %v71 = vld [vmem:[#allocation5 + $0x4] sm:$0xf]
    %v72 = vld [vmem:[#allocation5 + $0x8] sm:$0xf]
    %v73 = vld [vmem:[#allocation5 + $0xc] sm:$0xf]
    %v74 = vld [vmem:[#allocation5 + $0x10] sm:$0xf]
    %v75 = vld [vmem:[#allocation5 + $0x14] sm:$0xf]
    %v76 = vld [vmem:[#allocation5 + $0x18] sm:$0xf]
    %v77 = vld [vmem:[#allocation5 + $0x1c] sm:$0xf]
    %v78 = vld [vmem:[#allocation5 + $0x20] sm:$0xf]
    %v79 = vld [vmem:[#allocation5 + $0x24] sm:$0xf]
    %v80 = vld [vmem:[#allocation5 + $0x28] sm:$0xf]
    %v81 = vld [vmem:[#allocation5 + $0x2c] sm:$0xf]
    %v82 = vld [vmem:[#allocation5 + $0x30] sm:$0xf]
    %v83 = vld [vmem:[#allocation5 + $0x34] sm:$0xf]
    %v84 = vld [vmem:[#allocation5 + $0x38] sm:$0xf]
    %v85 = vld [vmem:[#allocation5 + $0x3c] sm:$0xf]
    %s86 = scalar_lea.vmem [#allocation5], 64
    %v87 = vld [vmem:[%s86] sm:$0xf]
    %v88 = vld [vmem:[%s86 + $0x4] sm:$0xf]
    %v89 = vld [vmem:[%s86 + $0x8] sm:$0xf]
    %v90 = vld [vmem:[%s86 + $0xc] sm:$0xf]
    %v91 = vld [vmem:[%s86 + $0x10] sm:$0xf]
    %v92 = vld [vmem:[%s86 + $0x14] sm:$0xf]
    %v93 = vld [vmem:[%s86 + $0x18] sm:$0xf]
    %v94 = vld [vmem:[%s86 + $0x1c] sm:$0xf]
    %v95 = vld [vmem:[%s86 + $0x20] sm:$0xf]
    %v96 = vld [vmem:[%s86 + $0x24] sm:$0xf]
    %v97 = vld [vmem:[%s86 + $0x28] sm:$0xf]
    %v98 = vld [vmem:[%s86 + $0x2c] sm:$0xf]
    %v99 = vld [vmem:[%s86 + $0x30] sm:$0xf]
    %v100 = vld [vmem:[%s86 + $0x34] sm:$0xf]
    %v101 = vld [vmem:[%s86 + $0x38] sm:$0xf]
    %v102 = vld [vmem:[%s86 + $0x3c] sm:$0xf]
    %v105 = vunpack.c.l.b16 %v63
    %v106 = vunpack.c.l.b16 %v64
    %v107 = vpack.c.b16 %v106, %v105
    %v125 = vunpack.c.l.b16 %v70
    %v126 = vunpack.c.l.b16 %v71
    %v127 = vunpack.c.l.b16 %v72
    %v128 = vunpack.c.l.b16 %v73
    %v129 = vunpack.c.l.b16 %v74
    %v130 = vunpack.c.l.b16 %v75
    %v131 = vunpack.c.l.b16 %v76
    %v132 = vunpack.c.l.b16 %v77
    %v133 = vunpack.c.l.b16 %v78
    %v134 = vunpack.c.l.b16 %v79
    %v135 = vunpack.c.l.b16 %v80
    %v136 = vunpack.c.l.b16 %v81
    %v137 = vunpack.c.l.b16 %v82
    %v138 = vunpack.c.l.b16 %v83
    %v139 = vunpack.c.l.b16 %v84
    %v140 = vunpack.c.l.b16 %v85
    %v141 = vpack.c.b16 %v126, %v125
    %v142 = vpack.c.b16 %v128, %v127
    %v143 = vpack.c.b16 %v130, %v129
    %v144 = vpack.c.b16 %v132, %v131
    %v145 = vpack.c.b16 %v134, %v133
    %v146 = vpack.c.b16 %v136, %v135
    %v147 = vpack.c.b16 %v138, %v137
    %v148 = vpack.c.b16 %v140, %v139
    %157 = vmatprep.subr.bf16.mxu0 0
    %158 = vmatpush1.bf16.msra.mxu0 %v148
    %159 = vmatprep.subr.bf16.mxu0 0
    %160 = vmatpush1.bf16.msra.mxu0 %v147
    %161 = vmatprep.subr.bf16.mxu0 0
    %162 = vmatpush1.bf16.msra.mxu0 %v146
    %163 = vmatprep.subr.bf16.mxu0 0
    %164 = vmatpush1.bf16.msra.mxu0 %v145
    %165 = vmatprep.subr.bf16.mxu0 0
    %166 = vmatpush1.bf16.msra.mxu0 %v144
    %167 = vmatprep.subr.bf16.mxu0 0
    %168 = vmatpush1.bf16.msra.mxu0 %v143
    %169 = vmatprep.subr.bf16.mxu0 0
    %170 = vmatpush1.bf16.msra.mxu0 %v142
    %171 = vmatprep.subr.bf16.mxu0 0
    %172 = vmatpush1.bf16.msra.mxu0 %v141
    %173 = vmatprep.subr.bf16.mxu0 0
    %174 = vmatpush2.bf16.msra.mxu0 0
    %175 = vmatprep.subr.bf16.mxu0 0
    %176 = vmatpush2.bf16.msra.mxu0 0
    %177 = vmatprep.subr.bf16.mxu0 0
    %178 = vmatpush2.bf16.msra.mxu0 0
    %179 = vmatprep.subr.bf16.mxu0 0
    %180 = vmatpush2.bf16.msra.mxu0 0
    %181 = vmatprep.subr.bf16.mxu0 0
    %182 = vmatpush2.bf16.msra.mxu0 0
    %183 = vmatprep.subr.bf16.mxu0 0
    %184 = vmatpush2.bf16.msra.mxu0 0
    %185 = vmatprep.subr.bf16.mxu0 0
    %186 = vmatpush2.bf16.msra.mxu0 0
    %187 = vmatprep.subr.bf16.mxu0 0
    %188 = vmatpush2.bf16.msra.mxu0 0
    %189 = vmatprep.mubr.bf16.mxu0 0
    %190 = vmatmul.mubr.bf16.gmra.mxu0 %v107
    %v191 = vpop.f32.mrf.mxu0
    %v192 = vadd.f32 0.0, %v191
    %v193 = vpop.f32.mrf.mxu0
    %v194 = vpop.f32.mrf.mxu0
    %v195 = vadd.f32 0.0, %v194
    %v196 = vpop.f32.mrf.mxu0
    %197 = vdwg.mxu0
    %v198 = vpack.c.bf16 %v195, %v192
    %v205 = vunpack.c.l.b16 %v57
    %v206 = vunpack.c.l.b16 %v58
    %v207 = vunpack.c.l.b16 %v59
    %v208 = vunpack.c.l.b16 %v60
    %v209 = vunpack.c.l.b16 %v61
    %v210 = vunpack.c.l.b16 %v62
    %v211 = vpack.c.b16 %v206, %v205
    %v212 = vpack.c.b16 %v208, %v207
    %v213 = vpack.c.b16 %v210, %v209
    %vm214 = vcmask 130048
    %v216 = vsel %vm214, %v211, 0
    %v219 = vsel %vm214, %v212, 0
    %v222 = vsel %vm214, %v213, 0
    %224 = vmatprep.subr.bf16.mxu0 0
    %225 = vmatpush1.bf16.msra.mxu0 0
    %226 = vmatprep.subr.bf16.mxu0 0
    %227 = vmatpush1.bf16.msra.mxu0 0
    %228 = vmatprep.subr.bf16.mxu0 0
    %229 = vmatpush1.bf16.msra.mxu0 0
    %230 = vmatprep.subr.bf16.mxu0 0
    %231 = vmatpush1.bf16.msra.mxu0 0
    %232 = vmatprep.subr.bf16.mxu0 0
    %233 = vmatpush1.bf16.msra.mxu0 0
    %234 = vmatprep.subr.bf16.mxu0 0
    %235 = vmatpush1.bf16.msra.mxu0 0
    %236 = vmatprep.subr.bf16.mxu0 0
    %237 = vmatpush1.bf16.msra.mxu0 0
    %238 = vmatprep.subr.bf16.mxu0 0
    %239 = vmatpush1.bf16.msra.mxu0 %v198
    %240 = vmatprep.subr.bf16.mxu0 0
    %241 = vmatpush2.bf16.msra.mxu0 0
    %242 = vmatprep.subr.bf16.mxu0 0
    %243 = vmatpush2.bf16.msra.mxu0 0
    %244 = vmatprep.subr.bf16.mxu0 0
    %245 = vmatpush2.bf16.msra.mxu0 0
    %246 = vmatprep.subr.bf16.mxu0 0
    %247 = vmatpush2.bf16.msra.mxu0 0
    %248 = vmatprep.subr.bf16.mxu0 0
    %249 = vmatpush2.bf16.msra.mxu0 0
    %250 = vmatprep.subr.bf16.mxu0 0
    %251 = vmatpush2.bf16.msra.mxu0 0
    %252 = vmatprep.subr.bf16.mxu0 0
    %253 = vmatpush2.bf16.msra.mxu0 0
    %254 = vmatprep.subr.bf16.mxu0 0
    %255 = vmatpush2.bf16.msra.mxu0 0
    %256 = vmatprep.mubr.bf16.mxu0 0
    %257 = vmatmul.mubr.bf16.gmra.mxu0 %v216
    %v258 = vpop.f32.mrf.mxu0
    %v259 = vadd.f32 0.0, %v258
    %v260 = vpop.f32.mrf.mxu0
    %v261 = vpop.f32.mrf.mxu0
    %v262 = vadd.f32 0.0, %v261
    %v263 = vpop.f32.mrf.mxu0
    %264 = vmatprep.mubr.bf16.mxu0 0
    %265 = vmatmul.mubr.bf16.gmra.mxu0 %v219
    %v266 = vpop.f32.mrf.mxu0
    %v267 = vadd.f32 0.0, %v266
    %v268 = vpop.f32.mrf.mxu0
    %v269 = vpop.f32.mrf.mxu0
    %v270 = vadd.f32 0.0, %v269
    %v271 = vpop.f32.mrf.mxu0
    %272 = vmatprep.mubr.bf16.mxu0 0
    %273 = vmatmul.mubr.bf16.gmra.mxu0 %v222
    %v274 = vpop.f32.mrf.mxu0
    %v275 = vadd.f32 0.0, %v274
    %v276 = vpop.f32.mrf.mxu0
    %v277 = vpop.f32.mrf.mxu0
    %v278 = vadd.f32 0.0, %v277
    %v279 = vpop.f32.mrf.mxu0
    %280 = vdwg.mxu0
    %vm281 = vcmp.lt.s32.totalorder %v69, 32
    %vm282 = vcmp.lt.s32.totalorder %v69, 64
    %v283 = vsel %vm282, %v267, %v275
    %v284 = vsel %vm282, %v270, %v278
    %v285 = vsel %vm281, %v259, %v283
    %v286 = vsel %vm281, %v262, %v284
    %v287 = vlaneseq
    %v288 = vshrl.u32 %v287, 7
    %v289 = vsub.s32 0, %v288
    %v290 = vrot.slane %v66, %v289
    %v291 = vadd.f32 %v285, %v290
    %v292 = vadd.f32 %v286, %v290
    %v293 = vmax.f32 %v291, 0.0
    %v294 = vmax.f32 %v292, 0.0
    %v295 = vpack.c.bf16 %v294, %v293
    %v296 = vlaneseq
    %v297 = vshrl.u32 %v296, 7
    %v298 = vsub.s32 1, %v297
    %v299 = vrot.slane %v66, %v298
    %v316 = vunpack.c.l.b16 %v87
    %v317 = vunpack.c.l.b16 %v88
    %v318 = vunpack.c.l.b16 %v89
    %v319 = vunpack.c.l.b16 %v90
    %v320 = vunpack.c.l.b16 %v91
    %v321 = vunpack.c.l.b16 %v92
    %v322 = vunpack.c.l.b16 %v93
    %v323 = vunpack.c.l.b16 %v94
    %v324 = vunpack.c.l.b16 %v95
    %v325 = vunpack.c.l.b16 %v96
    %v326 = vunpack.c.l.b16 %v97
    %v327 = vunpack.c.l.b16 %v98
    %v328 = vunpack.c.l.b16 %v99
    %v329 = vunpack.c.l.b16 %v100
    %v330 = vunpack.c.l.b16 %v101
    %v331 = vunpack.c.l.b16 %v102
    %v332 = vpack.c.b16 %v317, %v316
    %v333 = vpack.c.b16 %v319, %v318
    %v334 = vpack.c.b16 %v321, %v320
    %v335 = vpack.c.b16 %v323, %v322
    %v336 = vpack.c.b16 %v325, %v324
    %v337 = vpack.c.b16 %v327, %v326
    %v338 = vpack.c.b16 %v329, %v328
    %v339 = vpack.c.b16 %v331, %v330
    %348 = vmatprep.subr.bf16.mxu0 0
    %349 = vmatpush1.bf16.msra.mxu0 %v339
    %350 = vmatprep.subr.bf16.mxu0 0
    %351 = vmatpush1.bf16.msra.mxu0 %v338
    %352 = vmatprep.subr.bf16.mxu0 0
    %353 = vmatpush1.bf16.msra.mxu0 %v337
    %354 = vmatprep.subr.bf16.mxu0 0
    %355 = vmatpush1.bf16.msra.mxu0 %v336
    %356 = vmatprep.subr.bf16.mxu0 0
    %357 = vmatpush1.bf16.msra.mxu0 %v335
    %358 = vmatprep.subr.bf16.mxu0 0
    %359 = vmatpush1.bf16.msra.mxu0 %v334
    %360 = vmatprep.subr.bf16.mxu0 0
    %361 = vmatpush1.bf16.msra.mxu0 %v333
    %362 = vmatprep.subr.bf16.mxu0 0
    %363 = vmatpush1.bf16.msra.mxu0 %v332
    %364 = vmatprep.subr.bf16.mxu0 0
    %365 = vmatpush2.bf16.msra.mxu0 0
    %366 = vmatprep.subr.bf16.mxu0 0
    %367 = vmatpush2.bf16.msra.mxu0 0
    %368 = vmatprep.subr.bf16.mxu0 0
    %369 = vmatpush2.bf16.msra.mxu0 0
    %370 = vmatprep.subr.bf16.mxu0 0
    %371 = vmatpush2.bf16.msra.mxu0 0
    %372 = vmatprep.subr.bf16.mxu0 0
    %373 = vmatpush2.bf16.msra.mxu0 0
    %374 = vmatprep.subr.bf16.mxu0 0
    %375 = vmatpush2.bf16.msra.mxu0 0
    %376 = vmatprep.subr.bf16.mxu0 0
    %377 = vmatpush2.bf16.msra.mxu0 0
    %378 = vmatprep.subr.bf16.mxu0 0
    %379 = vmatpush2.bf16.msra.mxu0 0
    %380 = vmatprep.mubr.bf16.mxu0 0
    %381 = vmatmul.mubr.bf16.gmra.mxu0 %v295
    %v382 = vpop.f32.mrf.mxu0
    %v383 = vadd.f32 %v299, %v382
    %v384 = vpop.f32.mrf.mxu0
    %v385 = vpop.f32.mrf.mxu0
    %v386 = vadd.f32 %v299, %v385
    %v387 = vpop.f32.mrf.mxu0
    %388 = vdwg.mxu0
    %v389 = vpack.c.bf16 %v386, %v383
    %s390 = scalar_lea.vmem [#allocation5], 128
    %v391 = vld [vmem:[%s390] sm:$0xf]
    %v392 = vld [vmem:[%s390 + $0x4] sm:$0xf]
    %v393 = vld [vmem:[%s390 + $0x8] sm:$0xf]
    %v394 = vld [vmem:[%s390 + $0xc] sm:$0xf]
    %v395 = vld [vmem:[%s390 + $0x10] sm:$0xf]
    %v396 = vld [vmem:[%s390 + $0x14] sm:$0xf]
    %v397 = vld [vmem:[%s390 + $0x18] sm:$0xf]
    %v398 = vld [vmem:[%s390 + $0x1c] sm:$0xf]
    %v399 = vld [vmem:[%s390 + $0x20] sm:$0xf]
    %v400 = vld [vmem:[%s390 + $0x24] sm:$0xf]
    %v401 = vld [vmem:[%s390 + $0x28] sm:$0xf]
    %v402 = vld [vmem:[%s390 + $0x2c] sm:$0xf]
    %v403 = vld [vmem:[%s390 + $0x30] sm:$0xf]
    %v404 = vld [vmem:[%s390 + $0x34] sm:$0xf]
    %v405 = vld [vmem:[%s390 + $0x38] sm:$0xf]
    %v406 = vld [vmem:[%s390 + $0x3c] sm:$0xf]
    %v407 = vlaneseq
    %v408 = vshrl.u32 %v407, 7
    %v409 = vsub.s32 2, %v408
    %v410 = vrot.slane %v66, %v409
    %v427 = vunpack.c.l.b16 %v391
    %v428 = vunpack.c.l.b16 %v392
    %v429 = vunpack.c.l.b16 %v393
    %v430 = vunpack.c.l.b16 %v394
    %v431 = vunpack.c.l.b16 %v395
    %v432 = vunpack.c.l.b16 %v396
    %v433 = vunpack.c.l.b16 %v397
    %v434 = vunpack.c.l.b16 %v398
    %v435 = vunpack.c.l.b16 %v399
    %v436 = vunpack.c.l.b16 %v400
    %v437 = vunpack.c.l.b16 %v401
    %v438 = vunpack.c.l.b16 %v402
    %v439 = vunpack.c.l.b16 %v403
    %v440 = vunpack.c.l.b16 %v404
    %v441 = vunpack.c.l.b16 %v405
    %v442 = vunpack.c.l.b16 %v406
    %v443 = vpack.c.b16 %v428, %v427
    %v444 = vpack.c.b16 %v430, %v429
    %v445 = vpack.c.b16 %v432, %v431
    %v446 = vpack.c.b16 %v434, %v433
    %v447 = vpack.c.b16 %v436, %v435
    %v448 = vpack.c.b16 %v438, %v437
    %v449 = vpack.c.b16 %v440, %v439
    %v450 = vpack.c.b16 %v442, %v441
    %459 = vmatprep.subr.bf16.mxu0 0
    %460 = vmatpush1.bf16.msra.mxu0 %v450
    %461 = vmatprep.subr.bf16.mxu0 0
    %462 = vmatpush1.bf16.msra.mxu0 %v449
    %463 = vmatprep.subr.bf16.mxu0 0
    %464 = vmatpush1.bf16.msra.mxu0 %v448
    %465 = vmatprep.subr.bf16.mxu0 0
    %466 = vmatpush1.bf16.msra.mxu0 %v447
    %467 = vmatprep.subr.bf16.mxu0 0
    %468 = vmatpush1.bf16.msra.mxu0 %v446
    %469 = vmatprep.subr.bf16.mxu0 0
    %470 = vmatpush1.bf16.msra.mxu0 %v445
    %471 = vmatprep.subr.bf16.mxu0 0
    %472 = vmatpush1.bf16.msra.mxu0 %v444
    %473 = vmatprep.subr.bf16.mxu0 0
    %474 = vmatpush1.bf16.msra.mxu0 %v443
    %475 = vmatprep.subr.bf16.mxu0 0
    %476 = vmatpush2.bf16.msra.mxu0 0
    %477 = vmatprep.subr.bf16.mxu0 0
    %478 = vmatpush2.bf16.msra.mxu0 0
    %479 = vmatprep.subr.bf16.mxu0 0
    %480 = vmatpush2.bf16.msra.mxu0 0
    %481 = vmatprep.subr.bf16.mxu0 0
    %482 = vmatpush2.bf16.msra.mxu0 0
    %483 = vmatprep.subr.bf16.mxu0 0
    %484 = vmatpush2.bf16.msra.mxu0 0
    %485 = vmatprep.subr.bf16.mxu0 0
    %486 = vmatpush2.bf16.msra.mxu0 0
    %487 = vmatprep.subr.bf16.mxu0 0
    %488 = vmatpush2.bf16.msra.mxu0 0
    %489 = vmatprep.subr.bf16.mxu0 0
    %490 = vmatpush2.bf16.msra.mxu0 0
    %491 = vmatprep.mubr.bf16.mxu0 0
    %492 = vmatmul.mubr.bf16.gmra.mxu0 %v389
    %v493 = vpop.f32.mrf.mxu0
    %v494 = vadd.f32 %v410, %v493
    %v495 = vpop.f32.mrf.mxu0
    %v496 = vpop.f32.mrf.mxu0
    %v497 = vadd.f32 %v410, %v496
    %v498 = vpop.f32.mrf.mxu0
    %499 = vdwg.mxu0
    %v500 = vmax.f32 %v494, 0.0
    %v501 = vmax.f32 %v497, 0.0
    %v502 = vpack.c.bf16 %v501, %v500
    %s503 = scalar_lea.vmem [#allocation5], 192
    %v504 = vld [vmem:[%s503] sm:$0xf]
    %v505 = vld [vmem:[%s503 + $0x4] sm:$0xf]
    %v506 = vld [vmem:[%s503 + $0x8] sm:$0xf]
    %v507 = vld [vmem:[%s503 + $0xc] sm:$0xf]
    %v508 = vld [vmem:[%s503 + $0x10] sm:$0xf]
    %v509 = vld [vmem:[%s503 + $0x14] sm:$0xf]
    %v510 = vld [vmem:[%s503 + $0x18] sm:$0xf]
    %v511 = vld [vmem:[%s503 + $0x1c] sm:$0xf]
    %v512 = vld [vmem:[%s503 + $0x20] sm:$0xf]
    %v513 = vld [vmem:[%s503 + $0x24] sm:$0xf]
    %v514 = vld [vmem:[%s503 + $0x28] sm:$0xf]
    %v515 = vld [vmem:[%s503 + $0x2c] sm:$0xf]
    %v516 = vld [vmem:[%s503 + $0x30] sm:$0xf]
    %v517 = vld [vmem:[%s503 + $0x34] sm:$0xf]
    %v518 = vld [vmem:[%s503 + $0x38] sm:$0xf]
    %v519 = vld [vmem:[%s503 + $0x3c] sm:$0xf]
    %v520 = vlaneseq
    %v521 = vshrl.u32 %v520, 7
    %v522 = vsub.s32 3, %v521
    %v523 = vrot.slane %v66, %v522
    %v540 = vunpack.c.l.b16 %v504
    %v541 = vunpack.c.l.b16 %v505
    %v542 = vunpack.c.l.b16 %v506
    %v543 = vunpack.c.l.b16 %v507
    %v544 = vunpack.c.l.b16 %v508
    %v545 = vunpack.c.l.b16 %v509
    %v546 = vunpack.c.l.b16 %v510
    %v547 = vunpack.c.l.b16 %v511
    %v548 = vunpack.c.l.b16 %v512
    %v549 = vunpack.c.l.b16 %v513
    %v550 = vunpack.c.l.b16 %v514
    %v551 = vunpack.c.l.b16 %v515
    %v552 = vunpack.c.l.b16 %v516
    %v553 = vunpack.c.l.b16 %v517
    %v554 = vunpack.c.l.b16 %v518
    %v555 = vunpack.c.l.b16 %v519
    %v556 = vpack.c.b16 %v541, %v540
    %v557 = vpack.c.b16 %v543, %v542
    %v558 = vpack.c.b16 %v545, %v544
    %v559 = vpack.c.b16 %v547, %v546
    %v560 = vpack.c.b16 %v549, %v548
    %v561 = vpack.c.b16 %v551, %v550
    %v562 = vpack.c.b16 %v553, %v552
    %v563 = vpack.c.b16 %v555, %v554
    %572 = vmatprep.subr.bf16.mxu0 0
    %573 = vmatpush1.bf16.msra.mxu0 %v563
    %574 = vmatprep.subr.bf16.mxu0 0
    %575 = vmatpush1.bf16.msra.mxu0 %v562
    %576 = vmatprep.subr.bf16.mxu0 0
    %577 = vmatpush1.bf16.msra.mxu0 %v561
    %578 = vmatprep.subr.bf16.mxu0 0
    %579 = vmatpush1.bf16.msra.mxu0 %v560
    %580 = vmatprep.subr.bf16.mxu0 0
    %581 = vmatpush1.bf16.msra.mxu0 %v559
    %582 = vmatprep.subr.bf16.mxu0 0
    %583 = vmatpush1.bf16.msra.mxu0 %v558
    %584 = vmatprep.subr.bf16.mxu0 0
    %585 = vmatpush1.bf16.msra.mxu0 %v557
    %586 = vmatprep.subr.bf16.mxu0 0
    %587 = vmatpush1.bf16.msra.mxu0 %v556
    %588 = vmatprep.subr.bf16.mxu0 0
    %589 = vmatpush2.bf16.msra.mxu0 0
    %590 = vmatprep.subr.bf16.mxu0 0
    %591 = vmatpush2.bf16.msra.mxu0 0
    %592 = vmatprep.subr.bf16.mxu0 0
    %593 = vmatpush2.bf16.msra.mxu0 0
    %594 = vmatprep.subr.bf16.mxu0 0
    %595 = vmatpush2.bf16.msra.mxu0 0
    %596 = vmatprep.subr.bf16.mxu0 0
    %597 = vmatpush2.bf16.msra.mxu0 0
    %598 = vmatprep.subr.bf16.mxu0 0
    %599 = vmatpush2.bf16.msra.mxu0 0
    %600 = vmatprep.subr.bf16.mxu0 0
    %601 = vmatpush2.bf16.msra.mxu0 0
    %602 = vmatprep.subr.bf16.mxu0 0
    %603 = vmatpush2.bf16.msra.mxu0 0
    %604 = vmatprep.mubr.bf16.mxu0 0
    %605 = vmatmul.mubr.bf16.gmra.mxu0 %v502
    %v606 = vpop.f32.mrf.mxu0
    %v607 = vadd.f32 %v523, %v606
    %v608 = vpop.f32.mrf.mxu0
    %v609 = vpop.f32.mrf.mxu0
    %v610 = vadd.f32 %v523, %v609
    %v611 = vpop.f32.mrf.mxu0
    %612 = vdwg.mxu0
    %v613 = vpack.c.bf16 %v610, %v607
    %s614 = scalar_lea.vmem [#allocation5], 256
    %v615 = vld [vmem:[%s614] sm:$0xf]
    %v616 = vld [vmem:[%s614 + $0x4] sm:$0xf]
    %v617 = vld [vmem:[%s614 + $0x8] sm:$0xf]
    %v618 = vld [vmem:[%s614 + $0xc] sm:$0xf]
    %v619 = vld [vmem:[%s614 + $0x10] sm:$0xf]
    %v620 = vld [vmem:[%s614 + $0x14] sm:$0xf]
    %v621 = vld [vmem:[%s614 + $0x18] sm:$0xf]
    %v622 = vld [vmem:[%s614 + $0x1c] sm:$0xf]
    %v623 = vld [vmem:[%s614 + $0x20] sm:$0xf]
    %v624 = vld [vmem:[%s614 + $0x24] sm:$0xf]
    %v625 = vld [vmem:[%s614 + $0x28] sm:$0xf]
    %v626 = vld [vmem:[%s614 + $0x2c] sm:$0xf]
    %v627 = vld [vmem:[%s614 + $0x30] sm:$0xf]
    %v628 = vld [vmem:[%s614 + $0x34] sm:$0xf]
    %v629 = vld [vmem:[%s614 + $0x38] sm:$0xf]
    %v630 = vld [vmem:[%s614 + $0x3c] sm:$0xf]
    %s631 = scalar_lea.vmem [#allocation5], 320
    %v632 = vld [vmem:[%s631] sm:$0xf]
    %v633 = vld [vmem:[%s631 + $0x4] sm:$0xf]
    %v634 = vld [vmem:[%s631 + $0x8] sm:$0xf]
    %v635 = vld [vmem:[%s631 + $0xc] sm:$0xf]
    %v636 = vld [vmem:[%s631 + $0x10] sm:$0xf]
    %v637 = vld [vmem:[%s631 + $0x14] sm:$0xf]
    %v638 = vld [vmem:[%s631 + $0x18] sm:$0xf]
    %v639 = vld [vmem:[%s631 + $0x1c] sm:$0xf]
    %v640 = vld [vmem:[%s631 + $0x20] sm:$0xf]
    %v641 = vld [vmem:[%s631 + $0x24] sm:$0xf]
    %v642 = vld [vmem:[%s631 + $0x28] sm:$0xf]
    %v643 = vld [vmem:[%s631 + $0x2c] sm:$0xf]
    %v644 = vld [vmem:[%s631 + $0x30] sm:$0xf]
    %v645 = vld [vmem:[%s631 + $0x34] sm:$0xf]
    %v646 = vld [vmem:[%s631 + $0x38] sm:$0xf]
    %v647 = vld [vmem:[%s631 + $0x3c] sm:$0xf]
    %v664 = vunpack.c.l.b16 %v615
    %v665 = vunpack.c.l.b16 %v616
    %v666 = vunpack.c.l.b16 %v617
    %v667 = vunpack.c.l.b16 %v618
    %v668 = vunpack.c.l.b16 %v619
    %v669 = vunpack.c.l.b16 %v620
    %v670 = vunpack.c.l.b16 %v621
    %v671 = vunpack.c.l.b16 %v622
    %v672 = vunpack.c.l.b16 %v623
    %v673 = vunpack.c.l.b16 %v624
    %v674 = vunpack.c.l.b16 %v625
    %v675 = vunpack.c.l.b16 %v626
    %v676 = vunpack.c.l.b16 %v627
    %v677 = vunpack.c.l.b16 %v628
    %v678 = vunpack.c.l.b16 %v629
    %v679 = vunpack.c.l.b16 %v630
    %v680 = vpack.c.b16 %v665, %v664
    %v681 = vpack.c.b16 %v667, %v666
    %v682 = vpack.c.b16 %v669, %v668
    %v683 = vpack.c.b16 %v671, %v670
    %v684 = vpack.c.b16 %v673, %v672
    %v685 = vpack.c.b16 %v675, %v674
    %v686 = vpack.c.b16 %v677, %v676
    %v687 = vpack.c.b16 %v679, %v678
    %696 = vmatprep.subr.bf16.mxu0 0
    %697 = vmatpush1.bf16.msra.mxu0 %v687
    %698 = vmatprep.subr.bf16.mxu0 0
    %699 = vmatpush1.bf16.msra.mxu0 %v686
    %700 = vmatprep.subr.bf16.mxu0 0
    %701 = vmatpush1.bf16.msra.mxu0 %v685
    %702 = vmatprep.subr.bf16.mxu0 0
    %703 = vmatpush1.bf16.msra.mxu0 %v684
    %704 = vmatprep.subr.bf16.mxu0 0
    %705 = vmatpush1.bf16.msra.mxu0 %v683
    %706 = vmatprep.subr.bf16.mxu0 0
    %707 = vmatpush1.bf16.msra.mxu0 %v682
    %708 = vmatprep.subr.bf16.mxu0 0
    %709 = vmatpush1.bf16.msra.mxu0 %v681
    %710 = vmatprep.subr.bf16.mxu0 0
    %711 = vmatpush1.bf16.msra.mxu0 %v680
    %712 = vmatprep.subr.bf16.mxu0 0
    %713 = vmatpush2.bf16.msra.mxu0 0
    %714 = vmatprep.subr.bf16.mxu0 0
    %715 = vmatpush2.bf16.msra.mxu0 0
    %716 = vmatprep.subr.bf16.mxu0 0
    %717 = vmatpush2.bf16.msra.mxu0 0
    %718 = vmatprep.subr.bf16.mxu0 0
    %719 = vmatpush2.bf16.msra.mxu0 0
    %720 = vmatprep.subr.bf16.mxu0 0
    %721 = vmatpush2.bf16.msra.mxu0 0
    %722 = vmatprep.subr.bf16.mxu0 0
    %723 = vmatpush2.bf16.msra.mxu0 0
    %724 = vmatprep.subr.bf16.mxu0 0
    %725 = vmatpush2.bf16.msra.mxu0 0
    %726 = vmatprep.subr.bf16.mxu0 0
    %727 = vmatpush2.bf16.msra.mxu0 0
    %728 = vmatprep.mubr.bf16.mxu0 0
    %729 = vmatmul.mubr.bf16.gmra.mxu0 %v613
    %v730 = vpop.f32.mrf.mxu0
    %v731 = vadd.f32 0.0, %v730
    %v732 = vpop.f32.mrf.mxu0
    %v733 = vpop.f32.mrf.mxu0
    %v734 = vadd.f32 0.0, %v733
    %v735 = vpop.f32.mrf.mxu0
    %736 = vdwg.mxu0
    %v737 = vpack.c.bf16 %v734, %v731
    %738 = vmatprep.subr.bf16.mxu0 0
    %739 = vmatpush1.bf16.msra.mxu0 0
    %740 = vmatprep.subr.bf16.mxu0 0
    %741 = vmatpush1.bf16.msra.mxu0 0
    %742 = vmatprep.subr.bf16.mxu0 0
    %743 = vmatpush1.bf16.msra.mxu0 0
    %744 = vmatprep.subr.bf16.mxu0 0
    %745 = vmatpush1.bf16.msra.mxu0 0
    %746 = vmatprep.subr.bf16.mxu0 0
    %747 = vmatpush1.bf16.msra.mxu0 0
    %748 = vmatprep.subr.bf16.mxu0 0
    %749 = vmatpush1.bf16.msra.mxu0 0
    %750 = vmatprep.subr.bf16.mxu0 0
    %751 = vmatpush1.bf16.msra.mxu0 0
    %752 = vmatprep.subr.bf16.mxu0 0
    %753 = vmatpush1.bf16.msra.mxu0 %v737
    %754 = vmatprep.subr.bf16.mxu0 0
    %755 = vmatpush2.bf16.msra.mxu0 0
    %756 = vmatprep.subr.bf16.mxu0 0
    %757 = vmatpush2.bf16.msra.mxu0 0
    %758 = vmatprep.subr.bf16.mxu0 0
    %759 = vmatpush2.bf16.msra.mxu0 0
    %760 = vmatprep.subr.bf16.mxu0 0
    %761 = vmatpush2.bf16.msra.mxu0 0
    %762 = vmatprep.subr.bf16.mxu0 0
    %763 = vmatpush2.bf16.msra.mxu0 0
    %764 = vmatprep.subr.bf16.mxu0 0
    %765 = vmatpush2.bf16.msra.mxu0 0
    %766 = vmatprep.subr.bf16.mxu0 0
    %767 = vmatpush2.bf16.msra.mxu0 0
    %768 = vmatprep.subr.bf16.mxu0 0
    %769 = vmatpush2.bf16.msra.mxu0 0
    %770 = vmatprep.mubr.bf16.mxu0 0
    %771 = vmatmul.mubr.bf16.gmra.mxu0 %v216
    %v772 = vpop.f32.mrf.mxu0
    %v773 = vadd.f32 0.0, %v772
    %v774 = vpop.f32.mrf.mxu0
    %v775 = vpop.f32.mrf.mxu0
    %v776 = vadd.f32 0.0, %v775
    %v777 = vpop.f32.mrf.mxu0
    %778 = vmatprep.mubr.bf16.mxu0 0
    %779 = vmatmul.mubr.bf16.gmra.mxu0 %v219
    %v780 = vpop.f32.mrf.mxu0
    %v781 = vadd.f32 0.0, %v780
    %v782 = vpop.f32.mrf.mxu0
    %v783 = vpop.f32.mrf.mxu0
    %v784 = vadd.f32 0.0, %v783
    %v785 = vpop.f32.mrf.mxu0
    %786 = vmatprep.mubr.bf16.mxu0 0
    %787 = vmatmul.mubr.bf16.gmra.mxu0 %v222
    %v788 = vpop.f32.mrf.mxu0
    %v789 = vadd.f32 0.0, %v788
    %v790 = vpop.f32.mrf.mxu0
    %v791 = vpop.f32.mrf.mxu0
    %v792 = vadd.f32 0.0, %v791
    %v793 = vpop.f32.mrf.mxu0
    %794 = vdwg.mxu0
    %v795 = vsel %vm282, %v781, %v789
    %v796 = vsel %vm282, %v784, %v792
    %v797 = vsel %vm281, %v773, %v795
    %v798 = vsel %vm281, %v776, %v796
    %v799 = vlaneseq
    %v800 = vshrl.u32 %v799, 7
    %v801 = vsub.s32 4, %v800
    %v802 = vrot.slane %v66, %v801
    %v803 = vadd.f32 %v797, %v802
    %v804 = vadd.f32 %v798, %v802
    %v805 = vmax.f32 %v803, 0.0
    %v806 = vmax.f32 %v804, 0.0
    %v807 = vpack.c.bf16 %v806, %v805
    %v808 = vlaneseq
    %v809 = vshrl.u32 %v808, 7
    %v810 = vsub.s32 5, %v809
    %v811 = vrot.slane %v66, %v810
    %v828 = vunpack.c.l.b16 %v632
    %v829 = vunpack.c.l.b16 %v633
    %v830 = vunpack.c.l.b16 %v634
    %v831 = vunpack.c.l.b16 %v635
    %v832 = vunpack.c.l.b16 %v636
    %v833 = vunpack.c.l.b16 %v637
    %v834 = vunpack.c.l.b16 %v638
    %v835 = vunpack.c.l.b16 %v639
    %v836 = vunpack.c.l.b16 %v640
    %v837 = vunpack.c.l.b16 %v641
    %v838 = vunpack.c.l.b16 %v642
    %v839 = vunpack.c.l.b16 %v643
    %v840 = vunpack.c.l.b16 %v644
    %v841 = vunpack.c.l.b16 %v645
    %v842 = vunpack.c.l.b16 %v646
    %v843 = vunpack.c.l.b16 %v647
    %v844 = vpack.c.b16 %v829, %v828
    %v845 = vpack.c.b16 %v831, %v830
    %v846 = vpack.c.b16 %v833, %v832
    %v847 = vpack.c.b16 %v835, %v834
    %v848 = vpack.c.b16 %v837, %v836
    %v849 = vpack.c.b16 %v839, %v838
    %v850 = vpack.c.b16 %v841, %v840
    %v851 = vpack.c.b16 %v843, %v842
    %860 = vmatprep.subr.bf16.mxu0 0
    %861 = vmatpush1.bf16.msra.mxu0 %v851
    %862 = vmatprep.subr.bf16.mxu0 0
    %863 = vmatpush1.bf16.msra.mxu0 %v850
    %864 = vmatprep.subr.bf16.mxu0 0
    %865 = vmatpush1.bf16.msra.mxu0 %v849
    %866 = vmatprep.subr.bf16.mxu0 0
    %867 = vmatpush1.bf16.msra.mxu0 %v848
    %868 = vmatprep.subr.bf16.mxu0 0
    %869 = vmatpush1.bf16.msra.mxu0 %v847
    %870 = vmatprep.subr.bf16.mxu0 0
    %871 = vmatpush1.bf16.msra.mxu0 %v846
    %872 = vmatprep.subr.bf16.mxu0 0
    %873 = vmatpush1.bf16.msra.mxu0 %v845
    %874 = vmatprep.subr.bf16.mxu0 0
    %875 = vmatpush1.bf16.msra.mxu0 %v844
    %876 = vmatprep.subr.bf16.mxu0 0
    %877 = vmatpush2.bf16.msra.mxu0 0
    %878 = vmatprep.subr.bf16.mxu0 0
    %879 = vmatpush2.bf16.msra.mxu0 0
    %880 = vmatprep.subr.bf16.mxu0 0
    %881 = vmatpush2.bf16.msra.mxu0 0
    %882 = vmatprep.subr.bf16.mxu0 0
    %883 = vmatpush2.bf16.msra.mxu0 0
    %884 = vmatprep.subr.bf16.mxu0 0
    %885 = vmatpush2.bf16.msra.mxu0 0
    %886 = vmatprep.subr.bf16.mxu0 0
    %887 = vmatpush2.bf16.msra.mxu0 0
    %888 = vmatprep.subr.bf16.mxu0 0
    %889 = vmatpush2.bf16.msra.mxu0 0
    %890 = vmatprep.subr.bf16.mxu0 0
    %891 = vmatpush2.bf16.msra.mxu0 0
    %892 = vmatprep.mubr.bf16.mxu0 0
    %893 = vmatmul.mubr.bf16.gmra.mxu0 %v807
    %v894 = vpop.f32.mrf.mxu0
    %v895 = vadd.f32 %v811, %v894
    %v896 = vpop.f32.mrf.mxu0
    %v897 = vpop.f32.mrf.mxu0
    %v898 = vadd.f32 %v811, %v897
    %v899 = vpop.f32.mrf.mxu0
    %900 = vdwg.mxu0
    %v901 = vmax.f32 %v895, 0.0
    %v902 = vmax.f32 %v898, 0.0
    %v903 = vpack.c.bf16 %v902, %v901
    %s904 = scalar_lea.vmem [#allocation5], 384
    %v905 = vld [vmem:[%s904] sm:$0xf]
    %v906 = vld [vmem:[%s904 + $0x4] sm:$0xf]
    %v907 = vld [vmem:[%s904 + $0x8] sm:$0xf]
    %v908 = vld [vmem:[%s904 + $0xc] sm:$0xf]
    %v909 = vld [vmem:[%s904 + $0x10] sm:$0xf]
    %v910 = vld [vmem:[%s904 + $0x14] sm:$0xf]
    %v911 = vld [vmem:[%s904 + $0x18] sm:$0xf]
    %v912 = vld [vmem:[%s904 + $0x1c] sm:$0xf]
    %v913 = vld [vmem:[%s904 + $0x20] sm:$0xf]
    %v914 = vld [vmem:[%s904 + $0x24] sm:$0xf]
    %v915 = vld [vmem:[%s904 + $0x28] sm:$0xf]
    %v916 = vld [vmem:[%s904 + $0x2c] sm:$0xf]
    %v917 = vld [vmem:[%s904 + $0x30] sm:$0xf]
    %v918 = vld [vmem:[%s904 + $0x34] sm:$0xf]
    %v919 = vld [vmem:[%s904 + $0x38] sm:$0xf]
    %v920 = vld [vmem:[%s904 + $0x3c] sm:$0xf]
    %v921 = vlaneseq
    %v922 = vshrl.u32 %v921, 7
    %v923 = vsub.s32 6, %v922
    %v924 = vrot.slane %v66, %v923
    %v941 = vunpack.c.l.b16 %v905
    %v942 = vunpack.c.l.b16 %v906
    %v943 = vunpack.c.l.b16 %v907
    %v944 = vunpack.c.l.b16 %v908
    %v945 = vunpack.c.l.b16 %v909
    %v946 = vunpack.c.l.b16 %v910
    %v947 = vunpack.c.l.b16 %v911
    %v948 = vunpack.c.l.b16 %v912
    %v949 = vunpack.c.l.b16 %v913
    %v950 = vunpack.c.l.b16 %v914
    %v951 = vunpack.c.l.b16 %v915
    %v952 = vunpack.c.l.b16 %v916
    %v953 = vunpack.c.l.b16 %v917
    %v954 = vunpack.c.l.b16 %v918
    %v955 = vunpack.c.l.b16 %v919
    %v956 = vunpack.c.l.b16 %v920
    %v957 = vpack.c.b16 %v942, %v941
    %v958 = vpack.c.b16 %v944, %v943
    %v959 = vpack.c.b16 %v946, %v945
    %v960 = vpack.c.b16 %v948, %v947
    %v961 = vpack.c.b16 %v950, %v949
    %v962 = vpack.c.b16 %v952, %v951
    %v963 = vpack.c.b16 %v954, %v953
    %v964 = vpack.c.b16 %v956, %v955
    %973 = vmatprep.subr.bf16.mxu0 0
    %974 = vmatpush1.bf16.msra.mxu0 %v964
    %975 = vmatprep.subr.bf16.mxu0 0
    %976 = vmatpush1.bf16.msra.mxu0 %v963
    %977 = vmatprep.subr.bf16.mxu0 0
    %978 = vmatpush1.bf16.msra.mxu0 %v962
    %979 = vmatprep.subr.bf16.mxu0 0
    %980 = vmatpush1.bf16.msra.mxu0 %v961
    %981 = vmatprep.subr.bf16.mxu0 0
    %982 = vmatpush1.bf16.msra.mxu0 %v960
    %983 = vmatprep.subr.bf16.mxu0 0
    %984 = vmatpush1.bf16.msra.mxu0 %v959
    %985 = vmatprep.subr.bf16.mxu0 0
    %986 = vmatpush1.bf16.msra.mxu0 %v958
    %987 = vmatprep.subr.bf16.mxu0 0
    %988 = vmatpush1.bf16.msra.mxu0 %v957
    %989 = vmatprep.subr.bf16.mxu0 0
    %990 = vmatpush2.bf16.msra.mxu0 0
    %991 = vmatprep.subr.bf16.mxu0 0
    %992 = vmatpush2.bf16.msra.mxu0 0
    %993 = vmatprep.subr.bf16.mxu0 0
    %994 = vmatpush2.bf16.msra.mxu0 0
    %995 = vmatprep.subr.bf16.mxu0 0
    %996 = vmatpush2.bf16.msra.mxu0 0
    %997 = vmatprep.subr.bf16.mxu0 0
    %998 = vmatpush2.bf16.msra.mxu0 0
    %999 = vmatprep.subr.bf16.mxu0 0
    %1000 = vmatpush2.bf16.msra.mxu0 0
    %1001 = vmatprep.subr.bf16.mxu0 0
    %1002 = vmatpush2.bf16.msra.mxu0 0
    %1003 = vmatprep.subr.bf16.mxu0 0
    %1004 = vmatpush2.bf16.msra.mxu0 0
    %1005 = vmatprep.mubr.bf16.mxu0 0
    %1006 = vmatmul.mubr.bf16.gmra.mxu0 %v903
    %v1007 = vpop.f32.mrf.mxu0
    %v1008 = vadd.f32 %v924, %v1007
    %v1009 = vpop.f32.mrf.mxu0
    %v1010 = vpop.f32.mrf.mxu0
    %v1011 = vadd.f32 %v924, %v1010
    %v1012 = vpop.f32.mrf.mxu0
    %1013 = vdwg.mxu0
    %v1014 = vmax.f32 %v1008, 0.0
    %v1015 = vmax.f32 %v1011, 0.0
    %v1016 = vpack.c.bf16 %v1015, %v1014
    %v1018 = vsel %vm214, %v65, 0
    %1020 = vmatprep.subr.bf16.mxu0 0
    %1021 = vmatpush1.bf16.msra.mxu0 0
    %1022 = vmatprep.subr.bf16.mxu0 0
    %1023 = vmatpush1.bf16.msra.mxu0 0
    %1024 = vmatprep.subr.bf16.mxu0 0
    %1025 = vmatpush1.bf16.msra.mxu0 0
    %1026 = vmatprep.subr.bf16.mxu0 0
    %1027 = vmatpush1.bf16.msra.mxu0 0
    %1028 = vmatprep.subr.bf16.mxu0 0
    %1029 = vmatpush1.bf16.msra.mxu0 0
    %1030 = vmatprep.subr.bf16.mxu0 0
    %1031 = vmatpush1.bf16.msra.mxu0 0
    %1032 = vmatprep.subr.bf16.mxu0 0
    %1033 = vmatpush1.bf16.msra.mxu0 0
    %1034 = vmatprep.subr.bf16.mxu0 0
    %1035 = vmatpush1.bf16.msra.mxu0 %v1016
    %1036 = vmatprep.subr.bf16.mxu0 0
    %1037 = vmatpush2.bf16.msra.mxu0 0
    %1038 = vmatprep.subr.bf16.mxu0 0
    %1039 = vmatpush2.bf16.msra.mxu0 0
    %1040 = vmatprep.subr.bf16.mxu0 0
    %1041 = vmatpush2.bf16.msra.mxu0 0
    %1042 = vmatprep.subr.bf16.mxu0 0
    %1043 = vmatpush2.bf16.msra.mxu0 0
    %1044 = vmatprep.subr.bf16.mxu0 0
    %1045 = vmatpush2.bf16.msra.mxu0 0
    %1046 = vmatprep.subr.bf16.mxu0 0
    %1047 = vmatpush2.bf16.msra.mxu0 0
    %1048 = vmatprep.subr.bf16.mxu0 0
    %1049 = vmatpush2.bf16.msra.mxu0 0
    %1050 = vmatprep.subr.bf16.mxu0 0
    %1051 = vmatpush2.bf16.msra.mxu0 0
    %1052 = vmatprep.mubr.bf16.mxu0 0
    %1053 = vmatmul.mubr.bf16.gmra.mxu0 %v1018
    %v1054 = vpop.f32.mrf.mxu0
    %v1055 = vadd.f32 0.0, %v1054
    %v1056 = vpop.f32.mrf.mxu0
    %v1057 = vpop.f32.mrf.mxu0
    %v1058 = vpop.f32.mrf.mxu0
    %1059 = vdwg.mxu0
    %v1060 = vunpack.c.l.bf16 %v65
    %vm1061 = vcmask 123904
    %v1062 = vsel %vm1061, %v1060, 0.0
    %1063 = vadd.xlane.f32.xlu0 %v1062
    %v1064 = vpop.xlane.xlu0 %1063
    %v1065 = vlaneseq
    %v1066 = vshrl.u32 %v1065, 7
    %v1067 = vsub.s32 7, %v1066
    %v1068 = vrot.slane %v66, %v1067
    %v1069 = vmul.f32 %v1055, %v1068
    %vm1070 = vcmask 1041408
    %v1071 = vsel %vm1070, %v1069, 0.0
    %1072 = vadd.xlane.f32.xlu0 %v1071
    %v1073 = vpop.xlane.xlu0 %1072
    %v1074 = vlaneseq
    %v1075 = vshrl.u32 %v1074, 7
    %v1076 = vsub.s32 0, %v1075
    %v1077 = vrot.slane %v67, %v1076
    %v1078 = vmul.f32 %v1064, %v1077
    %v1079 = vadd.f32 %v1073, %v1078
    %1081 = vrot.lane.b32.xlu0 %v1077, 127
    %v1082 = vpop.permute.xlu0 %1081
    %v1084 = vadd.f32 %v1079, %v1082
    %1086 = vset.pattern.permute.xlu0 0
    %1087 = vperm.xlu0 %1086, %v1084
    %v1088 = vpop.permute.xlu0 %1087
    %1090 = vst [vmem:[#allocation8] sm:$0x3] %v1088
    // Predicated region
    $region26: #{tpu_custom_call.1} parent=1 // pred_check
      _
    $region27: #{tpu_custom_call.1} parent=1 // pred_check_branch
      %1092 = sbr.rel (0) target = $region29
    $region28: #{tpu_custom_call.1} parent=1 // pred_region
      %s1094 = ssub.s32 32, 32
      %1095 = vsyncadd [#allocation4], %s1094
      %s1097 = sshll.u32 [#allocation8], 4
      %s1098 = int_to_ptr.vmem [resolvable:$true] %s1097
      %1100 = dma.vmem_to_hbm [thread:$0]  %s1098, 32, %s3, [#allocation4]
    $region29: #{tpu_custom_call.1} parent=1 // pred_fallthru
      _
    // Predicated region
    $region30: #{tpu_custom_call.1} parent=1 // pred_check
      _
    $region31: #{tpu_custom_call.1} parent=1 // pred_check_branch
      %1102 = sbr.rel (0) target = $region33
    $region32: #{tpu_custom_call.1} parent=1 // pred_region
      %1103 = dma.done [#allocation4], 32
    $region33: #{tpu_custom_call.1} parent=1 // pred_fallthru
      _
    %1104 = vsyncpa [#allocation3], 1
    %1105 = vsyncpa [#allocation6], 1
    %1106 = vsyncpa [#allocation4], 1

</llo_original>
